<compile_context>
chip_gen: v7x
topology: tpu7x:2x2x1
jax: 0.10.0
libtpu: 0.0.40
codegen_flags: <defaults>
</compile_context>

<pallas_src>
import functools

import jax
import jax.numpy as jnp
from jax.experimental import pallas as pl
from jax.experimental.pallas import tpu as pltpu


# Conservative budget for the scalar-prefetched id array (1-D SMEM allocations
# pad to the next power of two of their byte size).
_MAX_IDS_SMEM_BYTES = 512 * 1024


def _round_up(x, m):
    return (x + m - 1) // m * m


def _next_pow2(x):
    x = max(int(x), 1)
    return 1 << (x - 1).bit_length()


def _embed_gather_hbm_kernel(ids_ref, table_ref, out_ref, sems, *, n_tokens, group):
    # ids_ref:   (N_pad,) int32 in SMEM (scalar-prefetched)
    # table_ref: (V, E_pad) in HBM (memory_space=pl.ANY, no auto-DMA)
    # out_ref:   (T, E_pad) in VMEM (this grid step's output tile)
    # sems:      (2*group,) DMA semaphores -> two row-groups in flight
    T = out_ref.shape[0]                      # static
    slots = 2 * group                         # static
    num_groups = T // group                   # static
    base = pl.program_id(0) * T
    # Rows of this tile that are real tokens (only the last tile is partial);
    # pad rows issue no DMA at all.
    valid = jnp.minimum(T, n_tokens - base)

    def rows_in(g):
        return jnp.clip(valid - g * group, 0, group)

    def start_group(g):
        @pl.loop(0, rows_in(g))
        def _(r):
            t = g * group + r
            row = ids_ref[base + t]           # SMEM scalar read (start path only)
            pltpu.make_async_copy(
                table_ref.at[row],            # one (E_pad,) row in HBM
                out_ref.at[t],                # gathered directly into the output tile
                sems.at[t % slots],
            ).start()

    def wait_group(g):
        @pl.loop(0, rows_in(g))
        def _(r):
            t = g * group + r
            # Same copy size, but src is a *fixed* row: the wait path has no
            # SMEM id read (.wait() breaks SMEM sst->sld forwarding).
            pltpu.make_async_copy(
                table_ref.at[0],
                out_ref.at[t],
                sems.at[t % slots],
            ).wait()

    # Prime two groups: between `group` and `2*group` DMAs stay in flight.
    start_group(0)
    if num_groups > 1:
        start_group(1)

    @pl.loop(0, num_groups)
    def _(g):
        wait_group(g)                         # frees this group's sem slots

        @pl.when(g + 2 < num_groups)
        def _():
            start_group(g + 2)                # reuses the slots just freed


def _embed_gather_vmem_kernel(ids_ref, table_ref, out_ref, *, n_tokens):
    # ids_ref:   (N_pad,) int32 in SMEM (scalar-prefetched)
    # table_ref: (V, E_pad) resident in VMEM (constant index_map -> copied once)
    # out_ref:   (T, E_pad) in VMEM
    T = out_ref.shape[0]
    base = pl.program_id(0) * T
    valid = jnp.minimum(T, n_tokens - base)   # skip last-tile pad rows entirely

    @pl.loop(0, valid)
    def _(t):
        row = ids_ref[base + t]               # SMEM scalar read
        out_ref[pl.ds(t, 1), :] = table_ref[pl.ds(row, 1), :]


@functools.partial(jax.jit, static_argnames=("token_tile", "dma_group", "table_in_vmem"))
def word_rep_forward(x_ids, embed_table, *, token_tile=1024, dma_group=32,
                     table_in_vmem=False):
    """WordRep.forward for use_elmo=False, dropout in eval mode (identity).

    x_ids:         (B, S) integer token indices
    embed_table:   (V, E) float, row 0 is the all-zero padding row
    token_tile:    tokens gathered per grid step (multiple of 8 and dma_group)
    dma_group:     rows started/awaited per DMA batch; 2*dma_group row DMAs
                   are kept in flight (HBM-gather path)
    table_in_vmem: keep the whole table resident in VMEM and gather with
                   in-kernel row reads (best for v5e/v6e-sized tables; keep
                   False for >~30 MiB f32 tables on v7x's 64 MiB VMEM)
    returns:       (B, S, E), same dtype as embed_table
    """
    B, S = x_ids.shape
    V, E = embed_table.shape
    N = B * S
    if token_tile % dma_group != 0 or token_tile % 8 != 0:
        raise ValueError("token_tile must be a multiple of 8 and of dma_group")

    E_pad = _round_up(E, 128)                 # lane-dense rows / DMAs / stores
    N_pad = _round_up(N, token_tile)          # ragged-safe grid
    num_tiles = N_pad // token_tile
    itemsize = jnp.dtype(embed_table.dtype).itemsize

    ids_smem_bytes = _next_pow2(4 * N_pad)    # 1-D SMEM pads to next pow2
    if ids_smem_bytes > _MAX_IDS_SMEM_BYTES:
        # TODO(synk): for very long documents, stream ids per tile (SMEM-blocked
        # input or a manual HBM->SMEM double buffer) instead of scalar prefetch.
        raise ValueError(
            f"flattened id array ({N_pad} ids -> {ids_smem_bytes} B of SMEM) "
            f"exceeds the {_MAX_IDS_SMEM_BYTES} B scalar-prefetch budget; "
            "split the batch or reduce tokens per call")

    table = embed_table
    if E_pad != E:
        table = jnp.pad(table, ((0, 0), (0, E_pad - E)))

    # Flatten + pad ids; padded slots never issue a gather (valid-count guard)
    # but keep them at 0 (the padding row) anyway.  Clamp so an out-of-range
    # id can never drive an out-of-bounds HBM DMA (PyTorch nn.Embedding would
    # raise here; we map it to a valid row instead).
    ids = jnp.clip(x_ids.reshape(-1).astype(jnp.int32), 0, V - 1)
    if N_pad != N:
        ids = jnp.pad(ids, (0, N_pad - N))

    cost = pl.CostEstimate(
        flops=0,
        transcendentals=0,
        bytes_accessed=(N * E_pad * itemsize          # gathered rows
                        + N_pad * E_pad * itemsize    # output write-back
                        + N_pad * 4
                        + (V * E_pad * itemsize if table_in_vmem else 0)),
    )
    out_shape = jax.ShapeDtypeStruct((N_pad, E_pad), table.dtype)

    if table_in_vmem:
        # v5e/v6e variant: table resident in VMEM, gather = dynamic row reads.
        table_bytes = _round_up(V, 8) * E_pad * itemsize
        tile_bytes = token_tile * E_pad * itemsize
        needed = 2 * table_bytes + 2 * tile_bytes + (2 << 20)
        if needed > (112 << 20):
            raise ValueError(
                "embedding table too large for table_in_vmem=True; use the "
                "default HBM-gather path (or a bf16 table)")
        kernel = functools.partial(_embed_gather_vmem_kernel, n_tokens=N)
        out = pl.pallas_call(
            kernel,
            out_shape=out_shape,
            grid_spec=pltpu.PrefetchScalarGridSpec(
                num_scalar_prefetch=1,        # ids land in SMEM
                grid=(num_tiles,),
                in_specs=[
                    # Whole table as one VMEM block with a constant index_map:
                    # DMA'd once, resident across all grid steps.
                    pl.BlockSpec((V, E_pad), lambda i, ids: (0, 0)),
                ],
                out_specs=pl.BlockSpec((token_tile, E_pad), lambda i, ids: (i, 0)),
            ),
            compiler_params=pltpu.CompilerParams(
                dimension_semantics=("parallel",),
                # Default scoped VMEM is only 16 MiB on v5e / 32 MiB on v6e.
                vmem_limit_bytes=int(max(needed, 32 << 20)),
            ),
            cost_estimate=cost,
        )(ids, table)
    else:
        # Default: HBM row gather with grouped, deeply-pipelined DMAs.
        kernel = functools.partial(
            _embed_gather_hbm_kernel, n_tokens=N, group=dma_group)
        out = pl.pallas_call(
            kernel,
            out_shape=out_shape,
            grid_spec=pltpu.PrefetchScalarGridSpec(
                num_scalar_prefetch=1,        # ids land in SMEM
                grid=(num_tiles,),
                in_specs=[
                    # Table stays in HBM; rows are DMA-gathered manually.
                    pl.BlockSpec(memory_space=pl.ANY),
                ],
                out_specs=pl.BlockSpec((token_tile, E_pad), lambda i, ids: (i, 0)),
                scratch_shapes=[pltpu.SemaphoreType.DMA((2 * dma_group,))],
            ),
            compiler_params=pltpu.CompilerParams(
                dimension_semantics=("parallel",),
            ),
            cost_estimate=cost,
        )(ids, table)

    # features = [embed(x)]; cat over dim=2 with a single feature -> identity.
    # embed_drop: nn.Dropout is identity at inference.
    # TODO(synk): ELMo branch (use_elmo=True) not implemented — external model.
    # NOTE: this [:N, :E] slice is a separate XLA copy of the whole output; in
    # a fused model, consume the padded (N_pad, E_pad) slab downstream instead.
    return out[:N, :E].reshape(B, S, E)


if __name__ == "__main__":
    key = jax.random.PRNGKey(0)
    k_emb, k_ids = jax.random.split(key)

    # Small, module-consistent shapes.  E=100 (args.embed_size) and a
    # non-tile-multiple token count exercise the E/N padding paths and the
    # last-tile valid-row guard.
    V = 512          # vocab size (len(w2ind) + 2)
    E = 100          # args.embed_size
    B, S = 2, 200    # batch, sequence length -> N = 400 tokens

    # nn.Embedding default init ~ N(0, 1); padding_idx=0 row is zeroed.
    embed_table = jax.random.normal(k_emb, (V, E), dtype=jnp.float32)
    embed_table = embed_table.at[0, :].set(0.0)

    x_ids = jax.random.randint(k_ids, (B, S), minval=0, maxval=V, dtype=jnp.int32)

    ref = jnp.take(embed_table, x_ids.reshape(-1), axis=0).reshape(B, S, E)

    # Path 1: HBM row gather with grouped DMAs (multi-tile: 400 -> 2 x 256).
    out_hbm = jax.block_until_ready(
        word_rep_forward(x_ids, embed_table, token_tile=256, dma_group=32))
    assert out_hbm.shape == (B, S, E), out_hbm.shape
    assert out_hbm.dtype == jnp.float32, out_hbm.dtype
    assert jnp.allclose(out_hbm, ref, atol=1e-6, rtol=1e-6), "HBM path mismatch"

    # Path 2: table resident in VMEM (v5e/v6e style), single 1024-row tile.
    out_vmem = jax.block_until_ready(
        word_rep_forward(x_ids, embed_table, token_tile=1024, table_in_vmem=True))
    assert out_vmem.shape == (B, S, E), out_vmem.shape
    assert out_vmem.dtype == jnp.float32, out_vmem.dtype
    assert jnp.allclose(out_vmem, ref, atol=1e-6, rtol=1e-6), "VMEM path mismatch"

    print("KERNEL_OK")
</pallas_src>

<mosaic_0001>
module attributes {stable_mosaic.version = 11 : i64} {
  func.func @_embed_gather_hbm_kernel(%arg0: i32, %arg1: memref<512xi32, #tpu.memory_space<smem>>, %arg2: memref<512x128xf32, #tpu.memory_space<any>>, %arg3: memref<256x128xf32, #tpu.memory_space<vmem>>, %arg4: memref<64x!tpu.dma_semaphore, #tpu.memory_space<semaphore_mem>>) attributes {dimension_semantics = [#tpu.dimension_semantics<parallel>], iteration_bounds = array<i64: 2>, scalar_prefetch = 1 : i64, scratch_operands = 1 : i64, tpu.core_type = #tpu.core_type<tc>, window_params = [{}, {transform_indices = @transform_1, window_bounds = array<i64: 256, 128>}]} {
    %c256_i32 = arith.constant 256 : i32
    %0 = arith.muli %arg0, %c256_i32 : i32
    %c400_i32 = arith.constant 400 : i32
    %1 = arith.subi %c400_i32, %0 : i32
    %c256_i32_0 = arith.constant 256 : i32
    %2 = arith.minsi %c256_i32_0, %1 : i32
    %c0_i32 = arith.constant 0 : i32
    %3 = arith.subi %2, %c0_i32 : i32
    %c0_i32_1 = arith.constant 0 : i32
    %c32_i32 = arith.constant 32 : i32
    %4 = arith.maxsi %c0_i32_1, %3 : i32
    %5 = arith.minsi %c32_i32, %4 : i32
    %c0_i32_2 = arith.constant 0 : i32
    %6 = arith.subi %5, %c0_i32_2 : i32
    %c1_i32 = arith.constant 1 : i32
    %c1_i32_3 = arith.constant 1 : i32
    %7 = arith.subi %c1_i32, %c1_i32_3 : i32
    %8 = arith.addi %6, %7 : i32
    %c1_i32_4 = arith.constant 1 : i32
    %9 = arith.divsi %8, %c1_i32_4 : i32
    %c1_i32_5 = arith.constant 1 : i32
    %c0_i32_6 = arith.constant 0 : i32
    %c0_i32_7 = arith.constant 0 : i32
    %10 = arith.subi %9, %c0_i32_7 : i32
    %11 = arith.addi %c0_i32_7, %10 : i32
    %c1_i32_8 = arith.constant 1 : i32
    scf.for %arg5 = %c0_i32_7 to %11 step %c1_i32_8  : i32 {
      %22 = arith.muli %arg5, %c1_i32_5 : i32
      %23 = arith.addi %c0_i32_6, %22 : i32
      %c0_i32_23 = arith.constant 0 : i32
      %24 = arith.addi %c0_i32_23, %23 : i32
      %25 = arith.addi %0, %24 : i32
      %26 = arith.index_cast %25 : i32 to index
      %27 = memref.load %arg1[%26] : memref<512xi32, #tpu.memory_space<smem>>
      %c64_i32 = arith.constant 64 : i32
      %c0_i32_24 = arith.constant 0 : i32
      %28 = arith.cmpi eq, %c64_i32, %c0_i32_24 : i32
      %c1_i32_25 = arith.constant 1 : i32
      %29 = arith.select %28, %c1_i32_25, %c64_i32 : i32
      %30 = arith.remsi %24, %29 : i32
      %c0_i32_26 = arith.constant 0 : i32
      %31 = arith.cmpi ne, %30, %c0_i32_26 : i32
      %c0_i32_27 = arith.constant 0 : i32
      %32 = arith.cmpi slt, %30, %c0_i32_27 : i32
      %c0_i32_28 = arith.constant 0 : i32
      %33 = arith.cmpi slt, %29, %c0_i32_28 : i32
      %34 = arith.xori %32, %33 : i1
      %35 = arith.andi %34, %31 : i1
      %36 = arith.addi %30, %29 : i32
      %37 = arith.select %35, %36, %30 : i32
      %c0_i32_29 = arith.constant 0 : i32
      %38 = tpu.memref_slice %arg2[%27, %c0_i32_29] : memref<512x128xf32, #tpu.memory_space<any>> -> memref<1x128xf32, #tpu.memory_space<any>>
      %39 = tpu.memref_squeeze %38 : memref<1x128xf32, #tpu.memory_space<any>> -> memref<128xf32, #tpu.memory_space<any>>
      %c0_i32_30 = arith.constant 0 : i32
      %40 = tpu.memref_slice %arg3[%24, %c0_i32_30] : memref<256x128xf32, #tpu.memory_space<vmem>> -> memref<1x128xf32, #tpu.memory_space<vmem>>
      %41 = tpu.memref_squeeze %40 : memref<1x128xf32, #tpu.memory_space<vmem>> -> memref<128xf32, #tpu.memory_space<vmem>>
      %42 = tpu.memref_slice %arg4[%37] : memref<64x!tpu.dma_semaphore, #tpu.memory_space<semaphore_mem>> -> memref<1x!tpu.dma_semaphore, #tpu.memory_space<semaphore_mem>>
      %43 = tpu.memref_squeeze %42 : memref<1x!tpu.dma_semaphore, #tpu.memory_space<semaphore_mem>> -> memref<!tpu.dma_semaphore, #tpu.memory_space<semaphore_mem>>
      tpu.enqueue_dma source(%39 : memref<128xf32, #tpu.memory_space<any>>) target(%41 : memref<128xf32, #tpu.memory_space<vmem>>) target_semaphore(%43 : memref<!tpu.dma_semaphore, #tpu.memory_space<semaphore_mem>>)
    }
    %c32_i32_9 = arith.constant 32 : i32
    %12 = arith.subi %2, %c32_i32_9 : i32
    %c0_i32_10 = arith.constant 0 : i32
    %c32_i32_11 = arith.constant 32 : i32
    %13 = arith.maxsi %c0_i32_10, %12 : i32
    %14 = arith.minsi %c32_i32_11, %13 : i32
    %c0_i32_12 = arith.constant 0 : i32
    %15 = arith.subi %14, %c0_i32_12 : i32
    %c1_i32_13 = arith.constant 1 : i32
    %c1_i32_14 = arith.constant 1 : i32
    %16 = arith.subi %c1_i32_13, %c1_i32_14 : i32
    %17 = arith.addi %15, %16 : i32
    %c1_i32_15 = arith.constant 1 : i32
    %18 = arith.divsi %17, %c1_i32_15 : i32
    %c1_i32_16 = arith.constant 1 : i32
    %c0_i32_17 = arith.constant 0 : i32
    %c0_i32_18 = arith.constant 0 : i32
    %19 = arith.subi %18, %c0_i32_18 : i32
    %20 = arith.addi %c0_i32_18, %19 : i32
    %c1_i32_19 = arith.constant 1 : i32
    scf.for %arg5 = %c0_i32_18 to %20 step %c1_i32_19  : i32 {
      %22 = arith.muli %arg5, %c1_i32_16 : i32
      %23 = arith.addi %c0_i32_17, %22 : i32
      %c32_i32_23 = arith.constant 32 : i32
      %24 = arith.addi %c32_i32_23, %23 : i32
      %25 = arith.addi %0, %24 : i32
      %26 = arith.index_cast %25 : i32 to index
      %27 = memref.load %arg1[%26] : memref<512xi32, #tpu.memory_space<smem>>
      %c64_i32 = arith.constant 64 : i32
      %c0_i32_24 = arith.constant 0 : i32
      %28 = arith.cmpi eq, %c64_i32, %c0_i32_24 : i32
      %c1_i32_25 = arith.constant 1 : i32
      %29 = arith.select %28, %c1_i32_25, %c64_i32 : i32
      %30 = arith.remsi %24, %29 : i32
      %c0_i32_26 = arith.constant 0 : i32
      %31 = arith.cmpi ne, %30, %c0_i32_26 : i32
      %c0_i32_27 = arith.constant 0 : i32
      %32 = arith.cmpi slt, %30, %c0_i32_27 : i32
      %c0_i32_28 = arith.constant 0 : i32
      %33 = arith.cmpi slt, %29, %c0_i32_28 : i32
      %34 = arith.xori %32, %33 : i1
      %35 = arith.andi %34, %31 : i1
      %36 = arith.addi %30, %29 : i32
      %37 = arith.select %35, %36, %30 : i32
      %c0_i32_29 = arith.constant 0 : i32
      %38 = tpu.memref_slice %arg2[%27, %c0_i32_29] : memref<512x128xf32, #tpu.memory_space<any>> -> memref<1x128xf32, #tpu.memory_space<any>>
      %39 = tpu.memref_squeeze %38 : memref<1x128xf32, #tpu.memory_space<any>> -> memref<128xf32, #tpu.memory_space<any>>
      %c0_i32_30 = arith.constant 0 : i32
      %40 = tpu.memref_slice %arg3[%24, %c0_i32_30] : memref<256x128xf32, #tpu.memory_space<vmem>> -> memref<1x128xf32, #tpu.memory_space<vmem>>
      %41 = tpu.memref_squeeze %40 : memref<1x128xf32, #tpu.memory_space<vmem>> -> memref<128xf32, #tpu.memory_space<vmem>>
      %42 = tpu.memref_slice %arg4[%37] : memref<64x!tpu.dma_semaphore, #tpu.memory_space<semaphore_mem>> -> memref<1x!tpu.dma_semaphore, #tpu.memory_space<semaphore_mem>>
      %43 = tpu.memref_squeeze %42 : memref<1x!tpu.dma_semaphore, #tpu.memory_space<semaphore_mem>> -> memref<!tpu.dma_semaphore, #tpu.memory_space<semaphore_mem>>
      tpu.enqueue_dma source(%39 : memref<128xf32, #tpu.memory_space<any>>) target(%41 : memref<128xf32, #tpu.memory_space<vmem>>) target_semaphore(%43 : memref<!tpu.dma_semaphore, #tpu.memory_space<semaphore_mem>>)
    }
    %c0_i32_20 = arith.constant 0 : i32
    %c8_i32 = arith.constant 8 : i32
    %21 = arith.addi %c0_i32_20, %c8_i32 : i32
    %c1_i32_21 = arith.constant 1 : i32
    scf.for %arg5 = %c0_i32_20 to %21 step %c1_i32_21  : i32 {
      %c1_i32_23 = arith.constant 1 : i32
      %22 = arith.muli %arg5, %c1_i32_23 : i32
      %c0_i32_24 = arith.constant 0 : i32
      %23 = arith.addi %c0_i32_24, %22 : i32
      %c32_i32_25 = arith.constant 32 : i32
      %24 = arith.muli %23, %c32_i32_25 : i32
      %25 = arith.subi %2, %24 : i32
      %c0_i32_26 = arith.constant 0 : i32
      %c32_i32_27 = arith.constant 32 : i32
      %26 = arith.maxsi %c0_i32_26, %25 : i32
      %27 = arith.minsi %c32_i32_27, %26 : i32
      %c0_i32_28 = arith.constant 0 : i32
      %28 = arith.subi %27, %c0_i32_28 : i32
      %c1_i32_29 = arith.constant 1 : i32
      %c1_i32_30 = arith.constant 1 : i32
      %29 = arith.subi %c1_i32_29, %c1_i32_30 : i32
      %30 = arith.addi %28, %29 : i32
      %c1_i32_31 = arith.constant 1 : i32
      %31 = arith.divsi %30, %c1_i32_31 : i32
      %c1_i32_32 = arith.constant 1 : i32
      %c0_i32_33 = arith.constant 0 : i32
      %c0_i32_34 = arith.constant 0 : i32
      %32 = arith.subi %31, %c0_i32_34 : i32
      %33 = arith.addi %c0_i32_34, %32 : i32
      %c1_i32_35 = arith.constant 1 : i32
      scf.for %arg6 = %c0_i32_34 to %33 step %c1_i32_35  : i32 {
        %38 = arith.muli %arg6, %c1_i32_32 : i32
        %39 = arith.addi %c0_i32_33, %38 : i32
        %c32_i32_38 = arith.constant 32 : i32
        %40 = arith.muli %23, %c32_i32_38 : i32
        %41 = arith.addi %40, %39 : i32
        %c64_i32 = arith.constant 64 : i32
        %c0_i32_39 = arith.constant 0 : i32
        %42 = arith.cmpi eq, %c64_i32, %c0_i32_39 : i32
        %c1_i32_40 = arith.constant 1 : i32
        %43 = arith.select %42, %c1_i32_40, %c64_i32 : i32
        %44 = arith.remsi %41, %43 : i32
        %c0_i32_41 = arith.constant 0 : i32
        %45 = arith.cmpi ne, %44, %c0_i32_41 : i32
        %c0_i32_42 = arith.constant 0 : i32
        %46 = arith.cmpi slt, %44, %c0_i32_42 : i32
        %c0_i32_43 = arith.constant 0 : i32
        %47 = arith.cmpi slt, %43, %c0_i32_43 : i32
        %48 = arith.xori %46, %47 : i1
        %49 = arith.andi %48, %45 : i1
        %50 = arith.addi %44, %43 : i32
        %51 = arith.select %49, %50, %44 : i32
        %c0_i32_44 = arith.constant 0 : i32
        %c0_i32_45 = arith.constant 0 : i32
        %52 = tpu.memref_slice %arg2[%c0_i32_44, %c0_i32_45] : memref<512x128xf32, #tpu.memory_space<any>> -> memref<1x128xf32, #tpu.memory_space<any>>
        %53 = tpu.memref_squeeze %52 : memref<1x128xf32, #tpu.memory_space<any>> -> memref<128xf32, #tpu.memory_space<any>>
        %c0_i32_46 = arith.constant 0 : i32
        %54 = tpu.memref_slice %arg3[%41, %c0_i32_46] : memref<256x128xf32, #tpu.memory_space<vmem>> -> memref<1x128xf32, #tpu.memory_space<vmem>>
        %55 = tpu.memref_squeeze %54 : memref<1x128xf32, #tpu.memory_space<vmem>> -> memref<128xf32, #tpu.memory_space<vmem>>
        %56 = tpu.memref_slice %arg4[%51] : memref<64x!tpu.dma_semaphore, #tpu.memory_space<semaphore_mem>> -> memref<1x!tpu.dma_semaphore, #tpu.memory_space<semaphore_mem>>
        %57 = tpu.memref_squeeze %56 : memref<1x!tpu.dma_semaphore, #tpu.memory_space<semaphore_mem>> -> memref<!tpu.dma_semaphore, #tpu.memory_space<semaphore_mem>>
        tpu.wait_dma2 semaphore(%57 : memref<!tpu.dma_semaphore, #tpu.memory_space<semaphore_mem>>) src(%53 : memref<128xf32, #tpu.memory_space<any>>) dst(%55 : memref<128xf32, #tpu.memory_space<vmem>>)
      }
      %c2_i32 = arith.constant 2 : i32
      %34 = arith.addi %23, %c2_i32 : i32
      %c8_i32_36 = arith.constant 8 : i32
      %35 = arith.cmpi slt, %34, %c8_i32_36 : i32
      %36 = arith.extui %35 : i1 to i32
      %c0_i32_37 = arith.constant 0 : i32
      %37 = arith.cmpi ne, %36, %c0_i32_37 : i32
      scf.if %37 {
        %c2_i32_38 = arith.constant 2 : i32
        %38 = arith.addi %23, %c2_i32_38 : i32
        %c32_i32_39 = arith.constant 32 : i32
        %39 = arith.muli %38, %c32_i32_39 : i32
        %40 = arith.subi %2, %39 : i32
        %c0_i32_40 = arith.constant 0 : i32
        %c32_i32_41 = arith.constant 32 : i32
        %41 = arith.maxsi %c0_i32_40, %40 : i32
        %42 = arith.minsi %c32_i32_41, %41 : i32
        %c0_i32_42 = arith.constant 0 : i32
        %43 = arith.subi %42, %c0_i32_42 : i32
        %c1_i32_43 = arith.constant 1 : i32
        %c1_i32_44 = arith.constant 1 : i32
        %44 = arith.subi %c1_i32_43, %c1_i32_44 : i32
        %45 = arith.addi %43, %44 : i32
        %c1_i32_45 = arith.constant 1 : i32
        %46 = arith.divsi %45, %c1_i32_45 : i32
        %c1_i32_46 = arith.constant 1 : i32
        %c0_i32_47 = arith.constant 0 : i32
        %c0_i32_48 = arith.constant 0 : i32
        %47 = arith.subi %46, %c0_i32_48 : i32
        %48 = arith.addi %c0_i32_48, %47 : i32
        %c1_i32_49 = arith.constant 1 : i32
        scf.for %arg6 = %c0_i32_48 to %48 step %c1_i32_49  : i32 {
          %49 = arith.muli %arg6, %c1_i32_46 : i32
          %50 = arith.addi %c0_i32_47, %49 : i32
          %c32_i32_50 = arith.constant 32 : i32
          %51 = arith.muli %38, %c32_i32_50 : i32
          %52 = arith.addi %51, %50 : i32
          %53 = arith.addi %0, %52 : i32
          %54 = arith.index_cast %53 : i32 to index
          %55 = memref.load %arg1[%54] : memref<512xi32, #tpu.memory_space<smem>>
          %c64_i32 = arith.constant 64 : i32
          %c0_i32_51 = arith.constant 0 : i32
          %56 = arith.cmpi eq, %c64_i32, %c0_i32_51 : i32
          %c1_i32_52 = arith.constant 1 : i32
          %57 = arith.select %56, %c1_i32_52, %c64_i32 : i32
          %58 = arith.remsi %52, %57 : i32
          %c0_i32_53 = arith.constant 0 : i32
          %59 = arith.cmpi ne, %58, %c0_i32_53 : i32
          %c0_i32_54 = arith.constant 0 : i32
          %60 = arith.cmpi slt, %58, %c0_i32_54 : i32
          %c0_i32_55 = arith.constant 0 : i32
          %61 = arith.cmpi slt, %57, %c0_i32_55 : i32
          %62 = arith.xori %60, %61 : i1
          %63 = arith.andi %62, %59 : i1
          %64 = arith.addi %58, %57 : i32
          %65 = arith.select %63, %64, %58 : i32
          %c0_i32_56 = arith.constant 0 : i32
          %66 = tpu.memref_slice %arg2[%55, %c0_i32_56] : memref<512x128xf32, #tpu.memory_space<any>> -> memref<1x128xf32, #tpu.memory_space<any>>
          %67 = tpu.memref_squeeze %66 : memref<1x128xf32, #tpu.memory_space<any>> -> memref<128xf32, #tpu.memory_space<any>>
          %c0_i32_57 = arith.constant 0 : i32
          %68 = tpu.memref_slice %arg3[%52, %c0_i32_57] : memref<256x128xf32, #tpu.memory_space<vmem>> -> memref<1x128xf32, #tpu.memory_space<vmem>>
          %69 = tpu.memref_squeeze %68 : memref<1x128xf32, #tpu.memory_space<vmem>> -> memref<128xf32, #tpu.memory_space<vmem>>
          %70 = tpu.memref_slice %arg4[%65] : memref<64x!tpu.dma_semaphore, #tpu.memory_space<semaphore_mem>> -> memref<1x!tpu.dma_semaphore, #tpu.memory_space<semaphore_mem>>
          %71 = tpu.memref_squeeze %70 : memref<1x!tpu.dma_semaphore, #tpu.memory_space<semaphore_mem>> -> memref<!tpu.dma_semaphore, #tpu.memory_space<semaphore_mem>>
          tpu.enqueue_dma source(%67 : memref<128xf32, #tpu.memory_space<any>>) target(%69 : memref<128xf32, #tpu.memory_space<vmem>>) target_semaphore(%71 : memref<!tpu.dma_semaphore, #tpu.memory_space<semaphore_mem>>)
        }
      } else {
      }
    }
    %c8_i32_22 = arith.constant 8 : i32
    return
  }
  func.func @transform_1(%arg0: i32, %arg1: memref<512xi32, #tpu.memory_space<smem>>) -> (i32, i32) {
    %c0_i32 = arith.constant 0 : i32
    %c0_i32_0 = arith.constant 0 : i32
    return %arg0, %c0_i32 : i32, i32
  }
}

</mosaic_0001>

<llo_original>
// kernel: word_rep_forward.1
$region0: #{word_rep_forward.1}
  #allocation0 [shape = 'u32[]', space=smem, size = 0x4, offset = 0x4, fixed_abs, tag = 'smem constant byte address 0x4 - core index']
  #allocation1 [shape = 'u32[144,128]{1,0:T(1,128)}', space=vmem, size = 0x12000, scoped, tag = 'internal scratch']
  #allocation2 [shape = 's32[64]{0}', space=sflag, size = 0x100, scoped, tag = 'scratch operand']
  #allocation3 [shape = 's32[1]{0}', space=sflag, size = 0x4, scoped, tag = 'scoped memory for word_rep_forward.1']
  #allocation4 [shape = 'u8[2048]{0}', space=smem, size = 0x800, scoped, tag = 'prefetched SMEM operand 0']
  #allocation5 [shape = 's32[]', space=sflag, size = 0x4, offset = 0, fixed_abs, tag = 'sflag constant byte address 0x0 - dummy sync flag']
  #allocation6 [shape = 's32[]', space=sflag, size = 0x4, offset = 0, fixed_abs, tag = 'sflag constant byte address 0x0 - dummy sync flag']
  #allocation7 [shape = 's32[]', space=sflag, size = 0x4, offset = 0, fixed_abs, tag = 'sflag constant byte address 0x0 - dummy sync flag']
  %s0 = inlined_call_operand.vmem [shape: s32[512], index: 0, kind: input, shape index: {}]
  %s1 = inlined_call_operand.vmem [shape: f32[512,128], index: 1, kind: input, shape index: {}]
  %s2 = inlined_call_operand.vmem [shape: f32[512,128], index: 2, kind: output, shape index: {}]
  %s3 = sld [smem:[#allocation0]]
  $region154: #{word_rep_forward.1} parent=0
    _
  %s5 = ssub.s32 1, %s3
  %s6 = scalar_select 0, %s5, %s3
  %s7 = sshll.u32 %s0, 4
  %s8 = int_to_ptr.vmem [resolvable:$true] %s7
  %10 = dma.vmem_to_smem %s8, 64, [#allocation4], [#allocation3]
  %11 = dma.done [#allocation3], 64
  %12 = sfence
  loop: start=0, step=1, limit=3
  $region2: #{word_rep_forward.1} parent=0 // loop_pre_header
    _
  $region3: #{word_rep_forward.1} parent=0 // loop_header
    %s14 = sphi 0, %s18
    %p15 = scmp.ge.s32.totalorder %s14, 3
    %s23 = sphi 0, %s25
    %s26 = sphi 0, %s23
    %s36 = sphi 0, %s26
  $region4: #{word_rep_forward.1} parent=0 // loop_header_branch
    %17 = sbr.rel (%p15) target = $region8
  $region5: #{word_rep_forward.1} parent=0 // loop_body
    %s19 = ssub.s32 %s14, 1
    %s20 = sadd.s32 %s14, 1
    %s21 = ssub.s32 %s14, %s20
    %p22 = scmp.eq.s32.totalorder %s21, 0
    %s24 = sadd.s32 %s23, 1
    %s25 = scalar_select %p22, %s23, %s24
    %p27 = pneg %p22
    %p28 = scmp.eq.s32.totalorder %s14, 1
    %p29 = por %p27, %p28
    %p30 = scmp.ne.s32.totalorder %s23, %s26
    %p31 = scmp.eq.s32.totalorder %s14, 0
    %p32 = por %p30, %p31
    %p33 = scmp.ne.s32.totalorder %s23, %s26
    %p34 = scmp.eq.s32.totalorder %s19, 1
    %p35 = por %p33, %p34
    %p37 = scmp.ne.s32.totalorder %s26, %s36
    %p38 = scmp.eq.s32.totalorder %s19, 0
    %p39 = por %p37, %p38
    %p40 = scmp.lt.s32.totalorder %s14, 2
    // Predicated region
    $region9: #{word_rep_forward.1} parent=5 // pred_check
      %p41 = pneg %p40
    $region10: #{word_rep_forward.1} parent=5 // pred_check_branch
      %43 = sbr.rel (%p41) target = $region12
    $region11: #{word_rep_forward.1} parent=5 // pred_region
      %p44 = pneg %p32
      %p45 = pneg %p29
      %s46 = smul.u32 32, %s14
      %p47 = scmp.lt.s32.totalorder %s46, 63
      %s48 = scalar_select %p47, %s46, 63
      %s49 = smul.addr %s48, 8
      %s50 = scalar_lea.vmem %s2, %s49
      %s51 = smul.u32 32, %s14
      %p52 = scmp.lt.s32.totalorder %s51, 63
      %s53 = scalar_select %p52, %s51, 63
      %s54 = smul.addr %s53, 8
      %s55 = scalar_lea.vmem %s2, %s54
      %s56 = smul.u32 32, %s14
      %s57 = smul.u32 %s14, 256
      %s58 = ssub.s32 400, %s57
      %p59 = scmp.lt.s32.totalorder %s58, 256
      %s60 = scalar_select %p59, %s58, 256
      %p61 = scmp.gt.s32.totalorder %s60, 0
      %s62 = scalar_select %p61, %s60, 0
      %p63 = scmp.lt.s32.totalorder %s62, 32
      %s64 = scalar_select %p63, %s62, 32
      // While loop
      $region13: #{word_rep_forward.1} parent=11 // loop_pre_header
        _
      $region14: #{word_rep_forward.1} parent=11 // loop_header
        %s66 = sphi 0, %s68
        %p67 = scmp.ge.s32.totalorder %s66, %s64
      $region15: #{word_rep_forward.1} parent=11 // loop_header_branch
        %70 = sbr.rel (%p67) target = $region19
      $region16: #{word_rep_forward.1} parent=11 // loop_body
        %s71 = sadd.s32 %s57, %s66
        %s72 = sld [smem:[#allocation4 + %s71]]
        %p73 = scmp.lt.s32.totalorder %s66, 0
        %s74 = ssub.s32 0, %s66
        %s75 = scalar_select %p73, %s74, %s66
        %s76 = sand.u32 %s75, 63
        %s77 = ssub.s32 0, %s76
        %s78 = scalar_select %p73, %s77, %s76
        %p79 = scmp.ne.s32.totalorder %s78, 0
        %p80 = scmp.lt.s32.totalorder %s78, 0
        %p81 = pnand %p80, %p79
        %p82 = pneg %p81
        %s83 = sadd.s32 %s78, 64
        %s84 = scalar_select %p82, %s83, %s78
        %s85 = scalar_lea.vmem %s1, %s72
        %s86 = scalar_lea.vmem %s55, %s66
        %s87 = scalar_lea.sflag [#allocation2], %s84
        %p89 = scmp.lt.u32.totalorder 1, 8
        %p90 = pneg %p89
        // Predicated region
        $region20: #{word_rep_forward.1} parent=16 // pred_check
          _
        $region21: #{word_rep_forward.1} parent=16 // pred_check_branch
          %92 = sbr.rel (%p89) target = $region23
        $region22: #{word_rep_forward.1} parent=16 // pred_region
          %s107 = sand.u32 1, 7
          %p108 = scmp.eq.s32.totalorder %s107, 0
          %p109 = pneg %p108
          // Predicated region
          $region35: #{word_rep_forward.1} parent=22 // pred_check
            _
          $region36: #{word_rep_forward.1} parent=22 // pred_check_branch
            %111 = sbr.rel (%p108) target = $region38
          $region37: #{word_rep_forward.1} parent=22 // pred_region
            %s112 = sand.u32 1, 7
            %s113 = ssub.s32 1, %s112
            %s114 = scalar_lea.vmem %s85, %s113
            %s115 = ssub.s32 1, %s112
            %s116 = scalar_lea.vmem %s86, %s115
            %s117 = sshllo.u32 0, %s112
            loop: start=0, step=1, limit=1
            $region39: #{word_rep_forward.1} parent=37 // loop_pre_header
              _
            $region40: #{word_rep_forward.1} parent=37 // loop_header
              %s119 = sphi 0, %s123
              %p120 = scmp.ge.s32.totalorder %s119, 1
              %s124 = sphi %s114, %s114
              %s125 = sphi %s116, %s116
            $region41: #{word_rep_forward.1} parent=37 // loop_header_branch
              %122 = sbr.rel (%p120) target = $region45
            $region42: #{word_rep_forward.1} parent=37 // loop_body
              %v126 = vld [vmem:[%s124] sm:%s117]
              %127 = vst [vmem:[%s125] sm:%s117] %v126
            $region43: #{word_rep_forward.1} parent=37 // loop_footer
              %s123 = sadd.s32 1, %s119
            $region44: #{word_rep_forward.1} parent=37 // loop_footer_branch
              %118 = sbr.rel target = $region40
            $region45: #{word_rep_forward.1} parent=37 // loop_exit
              _
          $region38: #{word_rep_forward.1} parent=22 // pred_fallthru
            _
        $region23: #{word_rep_forward.1} parent=16 // pred_fallthru
          _
        // Predicated region
        $region24: #{word_rep_forward.1} parent=16 // pred_check
          %p93 = pneg %p89
        $region25: #{word_rep_forward.1} parent=16 // pred_check_branch
          %95 = sbr.rel (%p93) target = $region27
        $region26: #{word_rep_forward.1} parent=16 // pred_region
          %s96 = sshllo.u32 0, 1
          loop: start=0, step=1, limit=1
          $region28: #{word_rep_forward.1} parent=26 // loop_pre_header
            _
          $region29: #{word_rep_forward.1} parent=26 // loop_header
            %s98 = sphi 0, %s102
            %p99 = scmp.ge.s32.totalorder %s98, 1
            %s103 = sphi %s85, %s85
            %s104 = sphi %s86, %s86
          $region30: #{word_rep_forward.1} parent=26 // loop_header_branch
            %101 = sbr.rel (%p99) target = $region34
          $region31: #{word_rep_forward.1} parent=26 // loop_body
            %v105 = vld [vmem:[%s103] sm:%s96]
            %106 = vst [vmem:[%s104] sm:%s96] %v105
          $region32: #{word_rep_forward.1} parent=26 // loop_footer
            %s102 = sadd.s32 1, %s98
          $region33: #{word_rep_forward.1} parent=26 // loop_footer_branch
            %97 = sbr.rel target = $region29
          $region34: #{word_rep_forward.1} parent=26 // loop_exit
            _
        $region27: #{word_rep_forward.1} parent=16 // pred_fallthru
          _
        // Predicated region
        $region46: #{word_rep_forward.1} parent=16 // pred_check
          _
        $region47: #{word_rep_forward.1} parent=16 // pred_check_branch
          %130 = sbr.rel (0) target = $region49
        $region48: #{word_rep_forward.1} parent=16 // pred_region
          %131 = vsyncadd %s87, 16
        $region49: #{word_rep_forward.1} parent=16 // pred_fallthru
          _
      $region17: #{word_rep_forward.1} parent=11 // loop_footer
        %s68 = sadd.s32 %s66, 1
      $region18: #{word_rep_forward.1} parent=11 // loop_footer_branch
        %65 = sbr.rel target = $region14
      $region19: #{word_rep_forward.1} parent=11 // loop_exit
        _
      %s132 = ssub.s32 %s60, 32
      %p133 = scmp.gt.s32.totalorder %s132, 0
      %s134 = scalar_select %p133, %s132, 0
      %p135 = scmp.lt.s32.totalorder %s134, 32
      %s136 = scalar_select %p135, %s134, 32
      // While loop
      $region50: #{word_rep_forward.1} parent=11 // loop_pre_header
        _
      $region51: #{word_rep_forward.1} parent=11 // loop_header
        %s138 = sphi 0, %s140
        %p139 = scmp.ge.s32.totalorder %s138, %s136
      $region52: #{word_rep_forward.1} parent=11 // loop_header_branch
        %142 = sbr.rel (%p139) target = $region56
      $region53: #{word_rep_forward.1} parent=11 // loop_body
        %s143 = sadd.s32 %s138, 32
        %s144 = sadd.s32 %s57, %s143
        %s145 = sld [smem:[#allocation4 + %s144]]
        %p146 = scmp.lt.s32.totalorder %s143, 0
        %s147 = ssub.s32 0, %s143
        %s148 = scalar_select %p146, %s147, %s143
        %s149 = sand.u32 %s148, 63
        %s150 = ssub.s32 0, %s149
        %s151 = scalar_select %p146, %s150, %s149
        %p152 = scmp.ne.s32.totalorder %s151, 0
        %p153 = scmp.lt.s32.totalorder %s151, 0
        %p154 = pnand %p153, %p152
        %p155 = pneg %p154
        %s156 = sadd.s32 %s151, 64
        %s157 = scalar_select %p155, %s156, %s151
        %s158 = scalar_lea.vmem %s1, %s145
        %s159 = scalar_lea.vmem %s55, %s143
        %s160 = scalar_lea.sflag [#allocation2], %s157
        %p162 = scmp.lt.u32.totalorder 1, 8
        %p163 = pneg %p162
        // Predicated region
        $region57: #{word_rep_forward.1} parent=53 // pred_check
          _
        $region58: #{word_rep_forward.1} parent=53 // pred_check_branch
          %165 = sbr.rel (%p162) target = $region60
        $region59: #{word_rep_forward.1} parent=53 // pred_region
          %s180 = sand.u32 1, 7
          %p181 = scmp.eq.s32.totalorder %s180, 0
          %p182 = pneg %p181
          // Predicated region
          $region72: #{word_rep_forward.1} parent=59 // pred_check
            _
          $region73: #{word_rep_forward.1} parent=59 // pred_check_branch
            %184 = sbr.rel (%p181) target = $region75
          $region74: #{word_rep_forward.1} parent=59 // pred_region
            %s185 = sand.u32 1, 7
            %s186 = ssub.s32 1, %s185
            %s187 = scalar_lea.vmem %s158, %s186
            %s188 = ssub.s32 1, %s185
            %s189 = scalar_lea.vmem %s159, %s188
            %s190 = sshllo.u32 0, %s185
            loop: start=0, step=1, limit=1
            $region76: #{word_rep_forward.1} parent=74 // loop_pre_header
              _
            $region77: #{word_rep_forward.1} parent=74 // loop_header
              %s192 = sphi 0, %s196
              %p193 = scmp.ge.s32.totalorder %s192, 1
              %s197 = sphi %s187, %s187
              %s198 = sphi %s189, %s189
            $region78: #{word_rep_forward.1} parent=74 // loop_header_branch
              %195 = sbr.rel (%p193) target = $region82
            $region79: #{word_rep_forward.1} parent=74 // loop_body
              %v199 = vld [vmem:[%s197] sm:%s190]
              %200 = vst [vmem:[%s198] sm:%s190] %v199
            $region80: #{word_rep_forward.1} parent=74 // loop_footer
              %s196 = sadd.s32 1, %s192
            $region81: #{word_rep_forward.1} parent=74 // loop_footer_branch
              %191 = sbr.rel target = $region77
            $region82: #{word_rep_forward.1} parent=74 // loop_exit
              _
          $region75: #{word_rep_forward.1} parent=59 // pred_fallthru
            _
        $region60: #{word_rep_forward.1} parent=53 // pred_fallthru
          _
        // Predicated region
        $region61: #{word_rep_forward.1} parent=53 // pred_check
          %p166 = pneg %p162
        $region62: #{word_rep_forward.1} parent=53 // pred_check_branch
          %168 = sbr.rel (%p166) target = $region64
        $region63: #{word_rep_forward.1} parent=53 // pred_region
          %s169 = sshllo.u32 0, 1
          loop: start=0, step=1, limit=1
          $region65: #{word_rep_forward.1} parent=63 // loop_pre_header
            _
          $region66: #{word_rep_forward.1} parent=63 // loop_header
            %s171 = sphi 0, %s175
            %p172 = scmp.ge.s32.totalorder %s171, 1
            %s176 = sphi %s158, %s158
            %s177 = sphi %s159, %s159
          $region67: #{word_rep_forward.1} parent=63 // loop_header_branch
            %174 = sbr.rel (%p172) target = $region71
          $region68: #{word_rep_forward.1} parent=63 // loop_body
            %v178 = vld [vmem:[%s176] sm:%s169]
            %179 = vst [vmem:[%s177] sm:%s169] %v178
          $region69: #{word_rep_forward.1} parent=63 // loop_footer
            %s175 = sadd.s32 1, %s171
          $region70: #{word_rep_forward.1} parent=63 // loop_footer_branch
            %170 = sbr.rel target = $region66
          $region71: #{word_rep_forward.1} parent=63 // loop_exit
            _
        $region64: #{word_rep_forward.1} parent=53 // pred_fallthru
          _
        // Predicated region
        $region83: #{word_rep_forward.1} parent=53 // pred_check
          _
        $region84: #{word_rep_forward.1} parent=53 // pred_check_branch
          %203 = sbr.rel (0) target = $region86
        $region85: #{word_rep_forward.1} parent=53 // pred_region
          %204 = vsyncadd %s160, 16
        $region86: #{word_rep_forward.1} parent=53 // pred_fallthru
          _
      $region54: #{word_rep_forward.1} parent=11 // loop_footer
        %s140 = sadd.s32 %s138, 1
      $region55: #{word_rep_forward.1} parent=11 // loop_footer_branch
        %137 = sbr.rel target = $region51
      $region56: #{word_rep_forward.1} parent=11 // loop_exit
        _
      loop: start=0, step=1, limit=8
      $region87: #{word_rep_forward.1} parent=11 // loop_pre_header
        _
      $region88: #{word_rep_forward.1} parent=11 // loop_header
        %s206 = sphi 0, %s210
        %p207 = scmp.ge.s32.totalorder %s206, 8
      $region89: #{word_rep_forward.1} parent=11 // loop_header_branch
        %209 = sbr.rel (%p207) target = $region93
      $region90: #{word_rep_forward.1} parent=11 // loop_body
        %s211 = smul.u32 %s206, 32
        %s212 = ssub.s32 %s60, %s211
        %p213 = scmp.gt.s32.totalorder %s212, 0
        %s214 = scalar_select %p213, %s212, 0
        %p215 = scmp.lt.s32.totalorder %s214, 32
        %s216 = scalar_select %p215, %s214, 32
        // While loop
        $region94: #{word_rep_forward.1} parent=90 // loop_pre_header
          _
        $region95: #{word_rep_forward.1} parent=90 // loop_header
          %s218 = sphi 0, %s220
          %p219 = scmp.ge.s32.totalorder %s218, %s216
        $region96: #{word_rep_forward.1} parent=90 // loop_header_branch
          %222 = sbr.rel (%p219) target = $region100
        $region97: #{word_rep_forward.1} parent=90 // loop_body
          %s223 = sadd.s32 %s211, %s218
          %p224 = scmp.lt.s32.totalorder %s223, 0
          %s225 = ssub.s32 0, %s223
          %s226 = scalar_select %p224, %s225, %s223
          %s227 = sand.u32 %s226, 63
          %s228 = ssub.s32 0, %s227
          %s229 = scalar_select %p224, %s228, %s227
          %p230 = scmp.ne.s32.totalorder %s229, 0
          %p231 = scmp.lt.s32.totalorder %s229, 0
          %p232 = pnand %p231, %p230
          %p233 = pneg %p232
          %s234 = sadd.s32 %s229, 64
          %s235 = scalar_select %p233, %s234, %s229
          %s236 = scalar_lea.sflag [#allocation2], %s235
          %238 = dma.done %s236, 16
        $region98: #{word_rep_forward.1} parent=90 // loop_footer
          %s220 = sadd.s32 %s218, 1
        $region99: #{word_rep_forward.1} parent=90 // loop_footer_branch
          %217 = sbr.rel target = $region95
        $region100: #{word_rep_forward.1} parent=90 // loop_exit
          _
        %s239 = sadd.s32 %s206, 2
        %p240 = scmp.lt.s32.totalorder %s239, 8
        // Predicated region
        $region101: #{word_rep_forward.1} parent=90 // pred_check
          %p241 = pneg %p240
        $region102: #{word_rep_forward.1} parent=90 // pred_check_branch
          %243 = sbr.rel (%p241) target = $region104
        $region103: #{word_rep_forward.1} parent=90 // pred_region
          %s244 = smul.u32 %s239, 32
          %s245 = ssub.s32 %s60, %s244
          %p246 = scmp.gt.s32.totalorder %s245, 0
          %s247 = scalar_select %p246, %s245, 0
          %p248 = scmp.lt.s32.totalorder %s247, 32
          %s249 = scalar_select %p248, %s247, 32
          // While loop
          $region105: #{word_rep_forward.1} parent=103 // loop_pre_header
            _
          $region106: #{word_rep_forward.1} parent=103 // loop_header
            %s251 = sphi 0, %s253
            %p252 = scmp.ge.s32.totalorder %s251, %s249
          $region107: #{word_rep_forward.1} parent=103 // loop_header_branch
            %255 = sbr.rel (%p252) target = $region111
          $region108: #{word_rep_forward.1} parent=103 // loop_body
            %s256 = sadd.s32 %s244, %s251
            %s257 = sadd.s32 %s57, %s256
            %s258 = sld [smem:[#allocation4 + %s257]]
            %p259 = scmp.lt.s32.totalorder %s256, 0
            %s260 = ssub.s32 0, %s256
            %s261 = scalar_select %p259, %s260, %s256
            %s262 = sand.u32 %s261, 63
            %s263 = ssub.s32 0, %s262
            %s264 = scalar_select %p259, %s263, %s262
            %p265 = scmp.ne.s32.totalorder %s264, 0
            %p266 = scmp.lt.s32.totalorder %s264, 0
            %p267 = pnand %p266, %p265
            %p268 = pneg %p267
            %s269 = sadd.s32 %s264, 64
            %s270 = scalar_select %p268, %s269, %s264
            %s271 = scalar_lea.vmem %s1, %s258
            %s272 = scalar_lea.vmem %s55, %s256
            %s273 = scalar_lea.sflag [#allocation2], %s270
            %p275 = scmp.lt.u32.totalorder 1, 8
            %p276 = pneg %p275
            // Predicated region
            $region112: #{word_rep_forward.1} parent=108 // pred_check
              _
            $region113: #{word_rep_forward.1} parent=108 // pred_check_branch
              %278 = sbr.rel (%p275) target = $region115
            $region114: #{word_rep_forward.1} parent=108 // pred_region
              %s293 = sand.u32 1, 7
              %p294 = scmp.eq.s32.totalorder %s293, 0
              %p295 = pneg %p294
              // Predicated region
              $region127: #{word_rep_forward.1} parent=114 // pred_check
                _
              $region128: #{word_rep_forward.1} parent=114 // pred_check_branch
                %297 = sbr.rel (%p294) target = $region130
              $region129: #{word_rep_forward.1} parent=114 // pred_region
                %s298 = sand.u32 1, 7
                %s299 = ssub.s32 1, %s298
                %s300 = scalar_lea.vmem %s271, %s299
                %s301 = ssub.s32 1, %s298
                %s302 = scalar_lea.vmem %s272, %s301
                %s303 = sshllo.u32 0, %s298
                loop: start=0, step=1, limit=1
                $region131: #{word_rep_forward.1} parent=129 // loop_pre_header
                  _
                $region132: #{word_rep_forward.1} parent=129 // loop_header
                  %s305 = sphi 0, %s309
                  %p306 = scmp.ge.s32.totalorder %s305, 1
                  %s310 = sphi %s300, %s300
                  %s311 = sphi %s302, %s302
                $region133: #{word_rep_forward.1} parent=129 // loop_header_branch
                  %308 = sbr.rel (%p306) target = $region137
                $region134: #{word_rep_forward.1} parent=129 // loop_body
                  %v312 = vld [vmem:[%s310] sm:%s303]
                  %313 = vst [vmem:[%s311] sm:%s303] %v312
                $region135: #{word_rep_forward.1} parent=129 // loop_footer
                  %s309 = sadd.s32 1, %s305
                $region136: #{word_rep_forward.1} parent=129 // loop_footer_branch
                  %304 = sbr.rel target = $region132
                $region137: #{word_rep_forward.1} parent=129 // loop_exit
                  _
              $region130: #{word_rep_forward.1} parent=114 // pred_fallthru
                _
            $region115: #{word_rep_forward.1} parent=108 // pred_fallthru
              _
            // Predicated region
            $region116: #{word_rep_forward.1} parent=108 // pred_check
              %p279 = pneg %p275
            $region117: #{word_rep_forward.1} parent=108 // pred_check_branch
              %281 = sbr.rel (%p279) target = $region119
            $region118: #{word_rep_forward.1} parent=108 // pred_region
              %s282 = sshllo.u32 0, 1
              loop: start=0, step=1, limit=1
              $region120: #{word_rep_forward.1} parent=118 // loop_pre_header
                _
              $region121: #{word_rep_forward.1} parent=118 // loop_header
                %s284 = sphi 0, %s288
                %p285 = scmp.ge.s32.totalorder %s284, 1
                %s289 = sphi %s271, %s271
                %s290 = sphi %s272, %s272
              $region122: #{word_rep_forward.1} parent=118 // loop_header_branch
                %287 = sbr.rel (%p285) target = $region126
              $region123: #{word_rep_forward.1} parent=118 // loop_body
                %v291 = vld [vmem:[%s289] sm:%s282]
                %292 = vst [vmem:[%s290] sm:%s282] %v291
              $region124: #{word_rep_forward.1} parent=118 // loop_footer
                %s288 = sadd.s32 1, %s284
              $region125: #{word_rep_forward.1} parent=118 // loop_footer_branch
                %283 = sbr.rel target = $region121
              $region126: #{word_rep_forward.1} parent=118 // loop_exit
                _
            $region119: #{word_rep_forward.1} parent=108 // pred_fallthru
              _
            // Predicated region
            $region138: #{word_rep_forward.1} parent=108 // pred_check
              _
            $region139: #{word_rep_forward.1} parent=108 // pred_check_branch
              %316 = sbr.rel (0) target = $region141
            $region140: #{word_rep_forward.1} parent=108 // pred_region
              %317 = vsyncadd %s273, 16
            $region141: #{word_rep_forward.1} parent=108 // pred_fallthru
              _
          $region109: #{word_rep_forward.1} parent=103 // loop_footer
            %s253 = sadd.s32 %s251, 1
          $region110: #{word_rep_forward.1} parent=103 // loop_footer_branch
            %250 = sbr.rel target = $region106
          $region111: #{word_rep_forward.1} parent=103 // loop_exit
            _
        $region104: #{word_rep_forward.1} parent=90 // pred_fallthru
          _
      $region91: #{word_rep_forward.1} parent=11 // loop_footer
        %s210 = sadd.s32 1, %s206
      $region92: #{word_rep_forward.1} parent=11 // loop_footer_branch
        %205 = sbr.rel target = $region88
      $region93: #{word_rep_forward.1} parent=11 // loop_exit
        _
      %s318 = smul.u32 32, %s14
      %p319 = scmp.lt.s32.totalorder %s318, 63
      %s320 = scalar_select %p319, %s318, 63
      %s321 = smul.addr %s320, 8
      %s322 = scalar_lea.vmem %s2, %s321
      // Predicated region
      $region142: #{word_rep_forward.1} parent=11 // pred_check
        %p323 = pneg %p29
      $region143: #{word_rep_forward.1} parent=11 // pred_check_branch
        %325 = sbr.rel (%p323) target = $region145
      $region144: #{word_rep_forward.1} parent=11 // pred_region
        %s326 = smul.u32 32, %s14
      $region145: #{word_rep_forward.1} parent=11 // pred_fallthru
        _
    $region12: #{word_rep_forward.1} parent=5 // pred_fallthru
      _
    %p327 = scmp.le.s32.totalorder 1, %s14
    // Predicated region
    $region146: #{word_rep_forward.1} parent=5 // pred_check
      %p328 = pneg %p327
    $region147: #{word_rep_forward.1} parent=5 // pred_check_branch
      %330 = sbr.rel (%p328) target = $region149
    $region148: #{word_rep_forward.1} parent=5 // pred_region
      %s331 = ssub.s32 %s14, 1
      // Predicated region
      $region150: #{word_rep_forward.1} parent=148 // pred_check
        %p332 = pneg %p35
      $region151: #{word_rep_forward.1} parent=148 // pred_check_branch
        %334 = sbr.rel (%p332) target = $region153
      $region152: #{word_rep_forward.1} parent=148 // pred_region
        %s335 = smul.u32 32, %s19
        %p336 = scmp.lt.s32.totalorder %s335, 63
        %s337 = scalar_select %p336, %s335, 63
        %s338 = smul.addr %s337, 8
        %s339 = scalar_lea.vmem %s2, %s338
      $region153: #{word_rep_forward.1} parent=148 // pred_fallthru
        _
    $region149: #{word_rep_forward.1} parent=5 // pred_fallthru
      _
  $region6: #{word_rep_forward.1} parent=0 // loop_footer
    %s18 = sadd.s32 1, %s14
  $region7: #{word_rep_forward.1} parent=0 // loop_footer_branch
    %13 = sbr.rel target = $region3
  $region8: #{word_rep_forward.1} parent=0 // loop_exit
    _
  %340 = vsyncmov [#allocation2]
  %s341 = vpop.sfrf %340
  %p342 = scmp.eq.s32.totalorder %s341, 0
  %p343 = pneg %p342
  %345 = shalt.err (%p343)
  %s346 = scalar_lea.sflag [#allocation2], 1
  %347 = vsyncmov %s346
  %s348 = vpop.sfrf %347
  %p349 = scmp.eq.s32.totalorder %s348, 0
  %p350 = pneg %p349
  %352 = shalt.err (%p350)
  %s353 = scalar_lea.sflag [#allocation2], 2
  %354 = vsyncmov %s353
  %s355 = vpop.sfrf %354
  %p356 = scmp.eq.s32.totalorder %s355, 0
  %p357 = pneg %p356
  %359 = shalt.err (%p357)
  %s360 = scalar_lea.sflag [#allocation2], 3
  %361 = vsyncmov %s360
  %s362 = vpop.sfrf %361
  %p363 = scmp.eq.s32.totalorder %s362, 0
  %p364 = pneg %p363
  %366 = shalt.err (%p364)
  %s367 = scalar_lea.sflag [#allocation2], 4
  %368 = vsyncmov %s367
  %s369 = vpop.sfrf %368
  %p370 = scmp.eq.s32.totalorder %s369, 0
  %p371 = pneg %p370
  %373 = shalt.err (%p371)
  %s374 = scalar_lea.sflag [#allocation2], 5
  %375 = vsyncmov %s374
  %s376 = vpop.sfrf %375
  %p377 = scmp.eq.s32.totalorder %s376, 0
  %p378 = pneg %p377
  %380 = shalt.err (%p378)
  %s381 = scalar_lea.sflag [#allocation2], 6
  %382 = vsyncmov %s381
  %s383 = vpop.sfrf %382
  %p384 = scmp.eq.s32.totalorder %s383, 0
  %p385 = pneg %p384
  %387 = shalt.err (%p385)
  %s388 = scalar_lea.sflag [#allocation2], 7
  %389 = vsyncmov %s388
  %s390 = vpop.sfrf %389
  %p391 = scmp.eq.s32.totalorder %s390, 0
  %p392 = pneg %p391
  %394 = shalt.err (%p392)
  %s395 = scalar_lea.sflag [#allocation2], 8
  %396 = vsyncmov %s395
  %s397 = vpop.sfrf %396
  %p398 = scmp.eq.s32.totalorder %s397, 0
  %p399 = pneg %p398
  %401 = shalt.err (%p399)
  %s402 = scalar_lea.sflag [#allocation2], 9
  %403 = vsyncmov %s402
  %s404 = vpop.sfrf %403
  %p405 = scmp.eq.s32.totalorder %s404, 0
  %p406 = pneg %p405
  %408 = shalt.err (%p406)
  %s409 = scalar_lea.sflag [#allocation2], 10
  %410 = vsyncmov %s409
  %s411 = vpop.sfrf %410
  %p412 = scmp.eq.s32.totalorder %s411, 0
  %p413 = pneg %p412
  %415 = shalt.err (%p413)
  %s416 = scalar_lea.sflag [#allocation2], 11
  %417 = vsyncmov %s416
  %s418 = vpop.sfrf %417
  %p419 = scmp.eq.s32.totalorder %s418, 0
  %p420 = pneg %p419
  %422 = shalt.err (%p420)
  %s423 = scalar_lea.sflag [#allocation2], 12
  %424 = vsyncmov %s423
  %s425 = vpop.sfrf %424
  %p426 = scmp.eq.s32.totalorder %s425, 0
  %p427 = pneg %p426
  %429 = shalt.err (%p427)
  %s430 = scalar_lea.sflag [#allocation2], 13
  %431 = vsyncmov %s430
  %s432 = vpop.sfrf %431
  %p433 = scmp.eq.s32.totalorder %s432, 0
  %p434 = pneg %p433
  %436 = shalt.err (%p434)
  %s437 = scalar_lea.sflag [#allocation2], 14
  %438 = vsyncmov %s437
  %s439 = vpop.sfrf %438
  %p440 = scmp.eq.s32.totalorder %s439, 0
  %p441 = pneg %p440
  %443 = shalt.err (%p441)
  %s444 = scalar_lea.sflag [#allocation2], 15
  %445 = vsyncmov %s444
  %s446 = vpop.sfrf %445
  %p447 = scmp.eq.s32.totalorder %s446, 0
  %p448 = pneg %p447
  %450 = shalt.err (%p448)
  %s451 = scalar_lea.sflag [#allocation2], 16
  %452 = vsyncmov %s451
  %s453 = vpop.sfrf %452
  %p454 = scmp.eq.s32.totalorder %s453, 0
  %p455 = pneg %p454
  %457 = shalt.err (%p455)
  %s458 = scalar_lea.sflag [#allocation2], 17
  %459 = vsyncmov %s458
  %s460 = vpop.sfrf %459
  %p461 = scmp.eq.s32.totalorder %s460, 0
  %p462 = pneg %p461
  %464 = shalt.err (%p462)
  %s465 = scalar_lea.sflag [#allocation2], 18
  %466 = vsyncmov %s465
  %s467 = vpop.sfrf %466
  %p468 = scmp.eq.s32.totalorder %s467, 0
  %p469 = pneg %p468
  %471 = shalt.err (%p469)
  %s472 = scalar_lea.sflag [#allocation2], 19
  %473 = vsyncmov %s472
  %s474 = vpop.sfrf %473
  %p475 = scmp.eq.s32.totalorder %s474, 0
  %p476 = pneg %p475
  %478 = shalt.err (%p476)
  %s479 = scalar_lea.sflag [#allocation2], 20
  %480 = vsyncmov %s479
  %s481 = vpop.sfrf %480
  %p482 = scmp.eq.s32.totalorder %s481, 0
  %p483 = pneg %p482
  %485 = shalt.err (%p483)
  %s486 = scalar_lea.sflag [#allocation2], 21
  %487 = vsyncmov %s486
  %s488 = vpop.sfrf %487
  %p489 = scmp.eq.s32.totalorder %s488, 0
  %p490 = pneg %p489
  %492 = shalt.err (%p490)
  %s493 = scalar_lea.sflag [#allocation2], 22
  %494 = vsyncmov %s493
  %s495 = vpop.sfrf %494
  %p496 = scmp.eq.s32.totalorder %s495, 0
  %p497 = pneg %p496
  %499 = shalt.err (%p497)
  %s500 = scalar_lea.sflag [#allocation2], 23
  %501 = vsyncmov %s500
  %s502 = vpop.sfrf %501
  %p503 = scmp.eq.s32.totalorder %s502, 0
  %p504 = pneg %p503
  %506 = shalt.err (%p504)
  %s507 = scalar_lea.sflag [#allocation2], 24
  %508 = vsyncmov %s507
  %s509 = vpop.sfrf %508
  %p510 = scmp.eq.s32.totalorder %s509, 0
  %p511 = pneg %p510
  %513 = shalt.err (%p511)
  %s514 = scalar_lea.sflag [#allocation2], 25
  %515 = vsyncmov %s514
  %s516 = vpop.sfrf %515
  %p517 = scmp.eq.s32.totalorder %s516, 0
  %p518 = pneg %p517
  %520 = shalt.err (%p518)
  %s521 = scalar_lea.sflag [#allocation2], 26
  %522 = vsyncmov %s521
  %s523 = vpop.sfrf %522
  %p524 = scmp.eq.s32.totalorder %s523, 0
  %p525 = pneg %p524
  %527 = shalt.err (%p525)
  %s528 = scalar_lea.sflag [#allocation2], 27
  %529 = vsyncmov %s528
  %s530 = vpop.sfrf %529
  %p531 = scmp.eq.s32.totalorder %s530, 0
  %p532 = pneg %p531
  %534 = shalt.err (%p532)
  %s535 = scalar_lea.sflag [#allocation2], 28
  %536 = vsyncmov %s535
  %s537 = vpop.sfrf %536
  %p538 = scmp.eq.s32.totalorder %s537, 0
  %p539 = pneg %p538
  %541 = shalt.err (%p539)
  %s542 = scalar_lea.sflag [#allocation2], 29
  %543 = vsyncmov %s542
  %s544 = vpop.sfrf %543
  %p545 = scmp.eq.s32.totalorder %s544, 0
  %p546 = pneg %p545
  %548 = shalt.err (%p546)
  %s549 = scalar_lea.sflag [#allocation2], 30
  %550 = vsyncmov %s549
  %s551 = vpop.sfrf %550
  %p552 = scmp.eq.s32.totalorder %s551, 0
  %p553 = pneg %p552
  %555 = shalt.err (%p553)
  %s556 = scalar_lea.sflag [#allocation2], 31
  %557 = vsyncmov %s556
  %s558 = vpop.sfrf %557
  %p559 = scmp.eq.s32.totalorder %s558, 0
  %p560 = pneg %p559
  %562 = shalt.err (%p560)
  %s563 = scalar_lea.sflag [#allocation2], 32
  %564 = vsyncmov %s563
  %s565 = vpop.sfrf %564
  %p566 = scmp.eq.s32.totalorder %s565, 0
  %p567 = pneg %p566
  %569 = shalt.err (%p567)
  %s570 = scalar_lea.sflag [#allocation2], 33
  %571 = vsyncmov %s570
  %s572 = vpop.sfrf %571
  %p573 = scmp.eq.s32.totalorder %s572, 0
  %p574 = pneg %p573
  %576 = shalt.err (%p574)
  %s577 = scalar_lea.sflag [#allocation2], 34
  %578 = vsyncmov %s577
  %s579 = vpop.sfrf %578
  %p580 = scmp.eq.s32.totalorder %s579, 0
  %p581 = pneg %p580
  %583 = shalt.err (%p581)
  %s584 = scalar_lea.sflag [#allocation2], 35
  %585 = vsyncmov %s584
  %s586 = vpop.sfrf %585
  %p587 = scmp.eq.s32.totalorder %s586, 0
  %p588 = pneg %p587
  %590 = shalt.err (%p588)
  %s591 = scalar_lea.sflag [#allocation2], 36
  %592 = vsyncmov %s591
  %s593 = vpop.sfrf %592
  %p594 = scmp.eq.s32.totalorder %s593, 0
  %p595 = pneg %p594
  %597 = shalt.err (%p595)
  %s598 = scalar_lea.sflag [#allocation2], 37
  %599 = vsyncmov %s598
  %s600 = vpop.sfrf %599
  %p601 = scmp.eq.s32.totalorder %s600, 0
  %p602 = pneg %p601
  %604 = shalt.err (%p602)
  %s605 = scalar_lea.sflag [#allocation2], 38
  %606 = vsyncmov %s605
  %s607 = vpop.sfrf %606
  %p608 = scmp.eq.s32.totalorder %s607, 0
  %p609 = pneg %p608
  %611 = shalt.err (%p609)
  %s612 = scalar_lea.sflag [#allocation2], 39
  %613 = vsyncmov %s612
  %s614 = vpop.sfrf %613
  %p615 = scmp.eq.s32.totalorder %s614, 0
  %p616 = pneg %p615
  %618 = shalt.err (%p616)
  %s619 = scalar_lea.sflag [#allocation2], 40
  %620 = vsyncmov %s619
  %s621 = vpop.sfrf %620
  %p622 = scmp.eq.s32.totalorder %s621, 0
  %p623 = pneg %p622
  %625 = shalt.err (%p623)
  %s626 = scalar_lea.sflag [#allocation2], 41
  %627 = vsyncmov %s626
  %s628 = vpop.sfrf %627
  %p629 = scmp.eq.s32.totalorder %s628, 0
  %p630 = pneg %p629
  %632 = shalt.err (%p630)
  %s633 = scalar_lea.sflag [#allocation2], 42
  %634 = vsyncmov %s633
  %s635 = vpop.sfrf %634
  %p636 = scmp.eq.s32.totalorder %s635, 0
  %p637 = pneg %p636
  %639 = shalt.err (%p637)
  %s640 = scalar_lea.sflag [#allocation2], 43
  %641 = vsyncmov %s640
  %s642 = vpop.sfrf %641
  %p643 = scmp.eq.s32.totalorder %s642, 0
  %p644 = pneg %p643
  %646 = shalt.err (%p644)
  %s647 = scalar_lea.sflag [#allocation2], 44
  %648 = vsyncmov %s647
  %s649 = vpop.sfrf %648
  %p650 = scmp.eq.s32.totalorder %s649, 0
  %p651 = pneg %p650
  %653 = shalt.err (%p651)
  %s654 = scalar_lea.sflag [#allocation2], 45
  %655 = vsyncmov %s654
  %s656 = vpop.sfrf %655
  %p657 = scmp.eq.s32.totalorder %s656, 0
  %p658 = pneg %p657
  %660 = shalt.err (%p658)
  %s661 = scalar_lea.sflag [#allocation2], 46
  %662 = vsyncmov %s661
  %s663 = vpop.sfrf %662
  %p664 = scmp.eq.s32.totalorder %s663, 0
  %p665 = pneg %p664
  %667 = shalt.err (%p665)
  %s668 = scalar_lea.sflag [#allocation2], 47
  %669 = vsyncmov %s668
  %s670 = vpop.sfrf %669
  %p671 = scmp.eq.s32.totalorder %s670, 0
  %p672 = pneg %p671
  %674 = shalt.err (%p672)
  %s675 = scalar_lea.sflag [#allocation2], 48
  %676 = vsyncmov %s675
  %s677 = vpop.sfrf %676
  %p678 = scmp.eq.s32.totalorder %s677, 0
  %p679 = pneg %p678
  %681 = shalt.err (%p679)
  %s682 = scalar_lea.sflag [#allocation2], 49
  %683 = vsyncmov %s682
  %s684 = vpop.sfrf %683
  %p685 = scmp.eq.s32.totalorder %s684, 0
  %p686 = pneg %p685
  %688 = shalt.err (%p686)
  %s689 = scalar_lea.sflag [#allocation2], 50
  %690 = vsyncmov %s689
  %s691 = vpop.sfrf %690
  %p692 = scmp.eq.s32.totalorder %s691, 0
  %p693 = pneg %p692
  %695 = shalt.err (%p693)
  %s696 = scalar_lea.sflag [#allocation2], 51
  %697 = vsyncmov %s696
  %s698 = vpop.sfrf %697
  %p699 = scmp.eq.s32.totalorder %s698, 0
  %p700 = pneg %p699
  %702 = shalt.err (%p700)
  %s703 = scalar_lea.sflag [#allocation2], 52
  %704 = vsyncmov %s703
  %s705 = vpop.sfrf %704
  %p706 = scmp.eq.s32.totalorder %s705, 0
  %p707 = pneg %p706
  %709 = shalt.err (%p707)
  %s710 = scalar_lea.sflag [#allocation2], 53
  %711 = vsyncmov %s710
  %s712 = vpop.sfrf %711
  %p713 = scmp.eq.s32.totalorder %s712, 0
  %p714 = pneg %p713
  %716 = shalt.err (%p714)
  %s717 = scalar_lea.sflag [#allocation2], 54
  %718 = vsyncmov %s717
  %s719 = vpop.sfrf %718
  %p720 = scmp.eq.s32.totalorder %s719, 0
  %p721 = pneg %p720
  %723 = shalt.err (%p721)
  %s724 = scalar_lea.sflag [#allocation2], 55
  %725 = vsyncmov %s724
  %s726 = vpop.sfrf %725
  %p727 = scmp.eq.s32.totalorder %s726, 0
  %p728 = pneg %p727
  %730 = shalt.err (%p728)
  %s731 = scalar_lea.sflag [#allocation2], 56
  %732 = vsyncmov %s731
  %s733 = vpop.sfrf %732
  %p734 = scmp.eq.s32.totalorder %s733, 0
  %p735 = pneg %p734
  %737 = shalt.err (%p735)
  %s738 = scalar_lea.sflag [#allocation2], 57
  %739 = vsyncmov %s738
  %s740 = vpop.sfrf %739
  %p741 = scmp.eq.s32.totalorder %s740, 0
  %p742 = pneg %p741
  %744 = shalt.err (%p742)
  %s745 = scalar_lea.sflag [#allocation2], 58
  %746 = vsyncmov %s745
  %s747 = vpop.sfrf %746
  %p748 = scmp.eq.s32.totalorder %s747, 0
  %p749 = pneg %p748
  %751 = shalt.err (%p749)
  %s752 = scalar_lea.sflag [#allocation2], 59
  %753 = vsyncmov %s752
  %s754 = vpop.sfrf %753
  %p755 = scmp.eq.s32.totalorder %s754, 0
  %p756 = pneg %p755
  %758 = shalt.err (%p756)
  %s759 = scalar_lea.sflag [#allocation2], 60
  %760 = vsyncmov %s759
  %s761 = vpop.sfrf %760
  %p762 = scmp.eq.s32.totalorder %s761, 0
  %p763 = pneg %p762
  %765 = shalt.err (%p763)
  %s766 = scalar_lea.sflag [#allocation2], 61
  %767 = vsyncmov %s766
  %s768 = vpop.sfrf %767
  %p769 = scmp.eq.s32.totalorder %s768, 0
  %p770 = pneg %p769
  %772 = shalt.err (%p770)
  %s773 = scalar_lea.sflag [#allocation2], 62
  %774 = vsyncmov %s773
  %s775 = vpop.sfrf %774
  %p776 = scmp.eq.s32.totalorder %s775, 0
  %p777 = pneg %p776
  %779 = shalt.err (%p777)
  %s780 = scalar_lea.sflag [#allocation2], 63
  %781 = vsyncmov %s780
  %s782 = vpop.sfrf %781
  %p783 = scmp.eq.s32.totalorder %s782, 0
  %p784 = pneg %p783
  %786 = shalt.err (%p784)

</llo_original>
